<compile_context>
chip_gen: v7x
topology: tpu7x:2x2x1
jax: 0.10.0
libtpu: 0.0.40
codegen_flags: <defaults>
</compile_context>

<pallas_src>
import functools

import jax
import jax.numpy as jnp
import numpy as np
from jax import lax
from jax.experimental import pallas as pl
from jax.experimental.pallas import tpu as pltpu

LANE = 128
SMOOTH = 1e-5


def _round_up(x, m):
    return (x + m - 1) // m * m


def _lane_fold(v):
    """(..., m*128) -> (..., 128) by tree-summing 128-lane chunks.

    Static, lane-aligned slices -> plain VPU vreg adds (no XLU cross-lane
    reduce, no relayout)."""
    m = v.shape[-1] // LANE
    chunks = [v[..., j * LANE:(j + 1) * LANE] for j in range(m)]
    while len(chunks) > 1:
        nxt = [chunks[i] + chunks[i + 1] for i in range(0, len(chunks) - 1, 2)]
        if len(chunks) % 2:
            nxt.append(chunks[-1])
        chunks = nxt
    return chunks[0]


def _dice_stats_kernel(x_ref, t_ref, o_ref, *, n_classes, tile, hw,
                       ragged, softmax):
    """Grid point (n, s): accumulate per-class lane-dense partial sums.

    x_ref: (nb, C, TILE) scores/logits    t_ref: (nb, 1, TILE) class labels
    o_ref: (nb, C, 3*128)  lanes [0:128]=intersect, [128:256]=sum(score^2),
                           lanes [256:384]=sum(onehot)
    """
    s = pl.program_id(1)

    @pl.when(s == 0)
    def _():
        o_ref[...] = jnp.zeros_like(o_ref)

    x = x_ref[...].astype(jnp.float32)                      # (nb, C, TILE)

    valid = None
    if ragged:
        col = lax.broadcasted_iota(jnp.int32, (1, 1, tile), 2) + s * tile
        valid = col < hw                                    # (1, 1, TILE)

    if softmax:
        # Fused softmax over the class (sublane) axis.  No pre-mask needed:
        # softmax is per-column and the post-mask select below removes any
        # garbage/NaN produced in out-of-bounds columns.
        x = x - jnp.max(x, axis=1, keepdims=True)
        x = jnp.exp(x)
        denom = jnp.sum(x, axis=1, keepdims=True)           # (nb, 1, TILE)
        inv = pl.reciprocal(denom, approx=True)
        inv = inv * (2.0 - denom * inv)                     # one Newton step
        x = x * inv
    if ragged:
        x = jnp.where(valid, x, 0.0)

    # One-hot in integer space (no float cast / float equality on class ids).
    t = t_ref[...].astype(jnp.int32)                        # (nb, 1, TILE)
    cls = lax.broadcasted_iota(jnp.int32, (1, n_classes, tile), 1)
    mask = t == cls                                         # (nb, C, TILE) bool
    if ragged:
        mask = jnp.logical_and(mask, valid)

    inter = jnp.where(mask, x, 0.0)                         # score * onehot
    zz = x * x                                              # score^2
    ohf = mask.astype(jnp.float32)                          # onehot == onehot^2

    if tile >= LANE:
        o_ref[:, :, 0:LANE] += _lane_fold(inter)
        o_ref[:, :, LANE:2 * LANE] += _lane_fold(zz)
        o_ref[:, :, 2 * LANE:3 * LANE] += _lane_fold(ohf)
    else:
        # Tiny images (hw < 128): drop raw per-lane terms into the slab; the
        # wrapper's 128-lane reduce finishes the sum.
        o_ref[:, :, 0:tile] += inter
        o_ref[:, :, LANE:LANE + tile] += zz
        o_ref[:, :, 2 * LANE:2 * LANE + tile] += ohf


def _pick_tiling(n, n_classes, hw, budget_bytes=3 << 20, max_lane_chunks=256):
    """Returns (nb images per step, spatial tile, #spatial tiles, ragged)."""
    c_pad = _round_up(n_classes, 8)
    rows = c_pad + 8                       # x rows + sublane-padded target rows
    cap = (budget_bytes // (4 * rows)) // LANE * LANE
    cap = max(LANE, min(cap, max_lane_chunks * LANE))
    if hw < LANE:
        tile = hw                          # full short row (equals array dim)
    elif hw % LANE == 0:
        tile = min(cap, hw)
    else:
        tile = min(cap, (hw // LANE) * LANE)   # last tile partial -> in-kernel mask
    s_tiles = pl.cdiv(hw, tile)
    nb = 1
    if s_tiles == 1:                       # small images: batch them per step
        per_img = 4 * rows * max(tile, LANE)
        nb = max(1, min(n, budget_bytes // per_img))
        while n % nb:
            nb -= 1
    ragged = s_tiles * tile != hw
    return nb, tile, s_tiles, ragged


def dice_loss_pallas(inputs, target, n_classes, weight=None, softmax=False):
    """Pallas DiceLoss.forward. inputs: [N,C,H,W]; target: [N,1,H,W] class ids."""
    N, C, H, W = inputs.shape
    assert C == n_classes, "predict & target shape do not match"
    assert target.shape == (N, 1, H, W)
    hw = H * W

    x = inputs.reshape(N, C, hw)           # free trailing-dim reshapes only
    t = target.reshape(N, 1, hw)

    nb, tile, s_tiles, ragged = _pick_tiling(N, C, hw)
    grid = (N // nb, s_tiles)

    kernel = functools.partial(
        _dice_stats_kernel, n_classes=C, tile=tile, hw=hw,
        ragged=ragged, softmax=bool(softmax))

    stats = pl.pallas_call(
        kernel,
        out_shape=jax.ShapeDtypeStruct((N, C, 3 * LANE), jnp.float32),
        grid_spec=pltpu.PrefetchScalarGridSpec(
            num_scalar_prefetch=0,
            grid=grid,
            in_specs=[
                # x: per-step block carrying nb images and the full class dim.
                pl.BlockSpec((nb, C, tile), lambda n, s: (n, 0, s)),
                # target: same spatial tile, read exactly once.
                pl.BlockSpec((nb, 1, tile), lambda n, s: (n, 0, s)),
            ],
            # Lane-dense per-image partial-sum slab, resident across spatial axis.
            out_specs=pl.BlockSpec((nb, C, 3 * LANE), lambda n, s: (n, 0, 0)),
        ),
        compiler_params=pltpu.CompilerParams(
            dimension_semantics=("parallel", "arbitrary"),
            vmem_limit_bytes=32 * 1024 * 1024),
    )(x, t)

    if weight is None:
        weight = [1.0] * n_classes
    weight = jnp.asarray(weight, jnp.float32)

    # Tiny finalize in plain JAX: 128-lane + batch reduce, dice, weighted mean.
    tot = jnp.sum(stats.reshape(N, C, 3, LANE), axis=(0, 3))   # (C, 3)
    intersect, z_sum, y_sum = tot[:, 0], tot[:, 1], tot[:, 2]
    dice = 1.0 - (2.0 * intersect + SMOOTH) / (z_sum + y_sum + SMOOTH)
    return jnp.sum(dice * weight) / n_classes


def dice_loss_ref(inputs, target, n_classes, weight=None, softmax=False):
    """Pure-JAX reference matching the PyTorch module."""
    if softmax:
        inputs = jax.nn.softmax(inputs, axis=1)
    onehot = jnp.concatenate(
        [(target == i).astype(jnp.float32) for i in range(n_classes)], axis=1)
    if weight is None:
        weight = [1.0] * n_classes
    loss = 0.0
    for i in range(n_classes):
        s = inputs[:, i].astype(jnp.float32)
        tt = onehot[:, i]
        inter = jnp.sum(s * tt)
        y = jnp.sum(tt * tt)
        z = jnp.sum(s * s)
        dice = 1.0 - (2.0 * inter + SMOOTH) / (z + y + SMOOTH)
        loss = loss + dice * weight[i]
    return loss / n_classes


if __name__ == "__main__":
    key = jax.random.PRNGKey(0)
    k1, k2, k3, k4 = jax.random.split(key, 4)

    # Case 1: fused-softmax path, hw a multiple of 128 (no masking), batched images.
    N, C, H, W = 2, 4, 16, 16
    logits = jax.random.normal(k1, (N, C, H, W), dtype=jnp.float32)
    labels = jax.random.randint(k2, (N, 1, H, W), 0, C).astype(jnp.float32)
    out1 = jax.block_until_ready(
        dice_loss_pallas(logits, labels, n_classes=C, softmax=True))
    ref1 = dice_loss_ref(logits, labels, n_classes=C, softmax=True)
    assert np.allclose(np.asarray(out1), np.asarray(ref1),
                       rtol=1e-4, atol=1e-4), (out1, ref1)

    # Case 2: raw scores, ragged spatial tiles (hw % 128 != 0), class weights.
    N2, C2, H2, W2 = 1, 3, 13, 15
    scores = jax.nn.sigmoid(jax.random.normal(k3, (N2, C2, H2, W2), jnp.float32))
    labels2 = jax.random.randint(k4, (N2, 1, H2, W2), 0, C2).astype(jnp.float32)
    w = [0.2, 0.3, 0.5]
    out2 = jax.block_until_ready(
        dice_loss_pallas(scores, labels2, n_classes=C2, weight=w, softmax=False))
    ref2 = dice_loss_ref(scores, labels2, n_classes=C2, weight=w, softmax=False)
    assert np.allclose(np.asarray(out2), np.asarray(ref2),
                       rtol=1e-4, atol=1e-4), (out2, ref2)

    print("KERNEL_OK")
</pallas_src>

<mosaic_0001>
module attributes {stable_mosaic.version = 11 : i64} {
  func.func @_dice_stats_kernel(%arg0: i32, %arg1: i32, %arg2: memref<2x4x256xf32, #tpu.memory_space<vmem>>, %arg3: memref<2x1x256xf32, #tpu.memory_space<vmem>>, %arg4: memref<2x4x384xf32, #tpu.memory_space<vmem>>) attributes {dimension_semantics = [#tpu.dimension_semantics<parallel>, #tpu.dimension_semantics<arbitrary>], iteration_bounds = array<i64: 1, 1>, scalar_prefetch = 0 : i64, scratch_operands = 0 : i64, tpu.core_type = #tpu.core_type<tc>, window_params = [{transform_indices = @transform_0, window_bounds = array<i64: 2, 4, 256>}, {transform_indices = @transform_1, window_bounds = array<i64: 2, 1, 256>}, {transform_indices = @transform_2, window_bounds = array<i64: 2, 4, 384>}]} {
    %c0_i32 = arith.constant 0 : i32
    %0 = arith.cmpi eq, %arg1, %c0_i32 : i32
    %1 = arith.extui %0 : i1 to i32
    %c0_i32_0 = arith.constant 0 : i32
    %2 = arith.cmpi ne, %1, %c0_i32_0 : i32
    scf.if %2 {
      %cst_25 = arith.constant 0.000000e+00 : f32
      %47 = vector.broadcast %cst_25 : f32 to vector<2x4x384xf32>
      %c0_26 = arith.constant 0 : index
      %c0_27 = arith.constant 0 : index
      %c0_28 = arith.constant 0 : index
      %48 = vector.load %arg4[%c0_26, %c0_27, %c0_28] : memref<2x4x384xf32, #tpu.memory_space<vmem>>, vector<2x4x384xf32>
      tpu.vector_store %arg4[%c0_26, %c0_27, %c0_28], %47 {strides = array<i32>} : memref<2x4x384xf32, #tpu.memory_space<vmem>>, vector<2x4x384xf32>,
    } else {
    }
    %c0 = arith.constant 0 : index
    %c0_1 = arith.constant 0 : index
    %c0_2 = arith.constant 0 : index
    %3 = vector.load %arg2[%c0, %c0_1, %c0_2] : memref<2x4x256xf32, #tpu.memory_space<vmem>>, vector<2x4x256xf32>
    %cst = arith.constant dense<0xFF800000> : vector<2x256xf32>
    %4 = vector.multi_reduction <maximumf>, %3, %cst [1] : vector<2x4x256xf32> to vector<2x256xf32>
    %5 = vector.shape_cast %4 : vector<2x256xf32> to vector<2x1x256xf32>
    %6 = vector.broadcast %5 : vector<2x1x256xf32> to vector<2x4x256xf32>
    %7 = arith.subf %3, %6 : vector<2x4x256xf32>
    %8 = math.exp %7 : vector<2x4x256xf32>
    %cst_3 = arith.constant dense<0.000000e+00> : vector<2x256xf32>
    %9 = vector.multi_reduction <add>, %8, %cst_3 [1] : vector<2x4x256xf32> to vector<2x256xf32>
    %10 = vector.shape_cast %9 : vector<2x256xf32> to vector<2x1x256xf32>
    %11 = tpu.reciprocal %10 {approx = true} : vector<2x1x256xf32> -> vector<2x1x256xf32>
    %12 = arith.mulf %10, %11 : vector<2x1x256xf32>
    %cst_4 = arith.constant 2.000000e+00 : f32
    %13 = vector.broadcast %cst_4 : f32 to vector<2x1x256xf32>
    %14 = arith.subf %13, %12 : vector<2x1x256xf32>
    %15 = arith.mulf %11, %14 : vector<2x1x256xf32>
    %16 = vector.broadcast %15 : vector<2x1x256xf32> to vector<2x4x256xf32>
    %17 = arith.mulf %8, %16 : vector<2x4x256xf32>
    %c0_5 = arith.constant 0 : index
    %c0_6 = arith.constant 0 : index
    %c0_7 = arith.constant 0 : index
    %18 = vector.load %arg3[%c0_5, %c0_6, %c0_7] : memref<2x1x256xf32, #tpu.memory_space<vmem>>, vector<2x1x256xf32>
    %19 = arith.fptosi %18 : vector<2x1x256xf32> to vector<2x1x256xi32>
    %20 = tpu.iota {dimensions = array<i32: 1>} : vector<1x4x256xi32>
    %21 = vector.broadcast %19 : vector<2x1x256xi32> to vector<2x4x256xi32>
    %22 = vector.broadcast %20 : vector<1x4x256xi32> to vector<2x4x256xi32>
    %23 = arith.cmpi eq, %21, %22 : vector<2x4x256xi32>
    %cst_8 = arith.constant 0.000000e+00 : f32
    %24 = vector.broadcast %cst_8 : f32 to vector<2x4x256xf32>
    %25 = arith.select %23, %17, %24 : vector<2x4x256xi1>, vector<2x4x256xf32>
    %26 = arith.mulf %17, %17 : vector<2x4x256xf32>
    %27 = arith.extui %23 : vector<2x4x256xi1> to vector<2x4x256xi32>
    %28 = arith.sitofp %27 : vector<2x4x256xi32> to vector<2x4x256xf32>
    %c0_9 = arith.constant 0 : index
    %c0_10 = arith.constant 0 : index
    %c0_11 = arith.constant 0 : index
    %29 = vector.load %arg4[%c0_9, %c0_10, %c0_11] : memref<2x4x384xf32, #tpu.memory_space<vmem>>, vector<2x4x128xf32>
    %30 = vector.extract_strided_slice %25 {offsets = [0, 0, 0], sizes = [2, 4, 128], strides = [1, 1, 1]} : vector<2x4x256xf32> to vector<2x4x128xf32>
    %31 = vector.extract_strided_slice %25 {offsets = [0, 0, 128], sizes = [2, 4, 128], strides = [1, 1, 1]} : vector<2x4x256xf32> to vector<2x4x128xf32>
    %32 = arith.addf %30, %31 : vector<2x4x128xf32>
    %33 = arith.addf %29, %32 : vector<2x4x128xf32>
    %c0_12 = arith.constant 0 : index
    %c0_13 = arith.constant 0 : index
    %c0_14 = arith.constant 0 : index
    %34 = vector.load %arg4[%c0_12, %c0_13, %c0_14] : memref<2x4x384xf32, #tpu.memory_space<vmem>>, vector<2x4x128xf32>
    tpu.vector_store %arg4[%c0_12, %c0_13, %c0_14], %33 {strides = array<i32>} : memref<2x4x384xf32, #tpu.memory_space<vmem>>, vector<2x4x128xf32>,
    %c0_15 = arith.constant 0 : index
    %c0_16 = arith.constant 0 : index
    %c128 = arith.constant 128 : index
    %35 = vector.load %arg4[%c0_15, %c0_16, %c128] : memref<2x4x384xf32, #tpu.memory_space<vmem>>, vector<2x4x128xf32>
    %36 = vector.extract_strided_slice %26 {offsets = [0, 0, 0], sizes = [2, 4, 128], strides = [1, 1, 1]} : vector<2x4x256xf32> to vector<2x4x128xf32>
    %37 = vector.extract_strided_slice %26 {offsets = [0, 0, 128], sizes = [2, 4, 128], strides = [1, 1, 1]} : vector<2x4x256xf32> to vector<2x4x128xf32>
    %38 = arith.addf %36, %37 : vector<2x4x128xf32>
    %39 = arith.addf %35, %38 : vector<2x4x128xf32>
    %c0_17 = arith.constant 0 : index
    %c0_18 = arith.constant 0 : index
    %c128_19 = arith.constant 128 : index
    %40 = vector.load %arg4[%c0_17, %c0_18, %c128_19] : memref<2x4x384xf32, #tpu.memory_space<vmem>>, vector<2x4x128xf32>
    tpu.vector_store %arg4[%c0_17, %c0_18, %c128_19], %39 {strides = array<i32>} : memref<2x4x384xf32, #tpu.memory_space<vmem>>, vector<2x4x128xf32>,
    %c0_20 = arith.constant 0 : index
    %c0_21 = arith.constant 0 : index
    %c256 = arith.constant 256 : index
    %41 = vector.load %arg4[%c0_20, %c0_21, %c256] : memref<2x4x384xf32, #tpu.memory_space<vmem>>, vector<2x4x128xf32>
    %42 = vector.extract_strided_slice %28 {offsets = [0, 0, 0], sizes = [2, 4, 128], strides = [1, 1, 1]} : vector<2x4x256xf32> to vector<2x4x128xf32>
    %43 = vector.extract_strided_slice %28 {offsets = [0, 0, 128], sizes = [2, 4, 128], strides = [1, 1, 1]} : vector<2x4x256xf32> to vector<2x4x128xf32>
    %44 = arith.addf %42, %43 : vector<2x4x128xf32>
    %45 = arith.addf %41, %44 : vector<2x4x128xf32>
    %c0_22 = arith.constant 0 : index
    %c0_23 = arith.constant 0 : index
    %c256_24 = arith.constant 256 : index
    %46 = vector.load %arg4[%c0_22, %c0_23, %c256_24] : memref<2x4x384xf32, #tpu.memory_space<vmem>>, vector<2x4x128xf32>
    tpu.vector_store %arg4[%c0_22, %c0_23, %c256_24], %45 {strides = array<i32>} : memref<2x4x384xf32, #tpu.memory_space<vmem>>, vector<2x4x128xf32>,
    return
  }
  func.func @transform_0(%arg0: i32, %arg1: i32) -> (i32, i32, i32) {
    %c0_i32 = arith.constant 0 : i32
    %c0_i32_0 = arith.constant 0 : i32
    return %arg0, %c0_i32, %arg1 : i32, i32, i32
  }
  func.func @transform_1(%arg0: i32, %arg1: i32) -> (i32, i32, i32) {
    %c0_i32 = arith.constant 0 : i32
    %c0_i32_0 = arith.constant 0 : i32
    return %arg0, %c0_i32, %arg1 : i32, i32, i32
  }
  func.func @transform_2(%arg0: i32, %arg1: i32) -> (i32, i32, i32) {
    %c0_i32 = arith.constant 0 : i32
    %c0_i32_0 = arith.constant 0 : i32
    %c0_i32_1 = arith.constant 0 : i32
    return %arg0, %c0_i32, %c0_i32_0 : i32, i32, i32
  }
}

</mosaic_0001>

<llo_original>
// kernel: tpu_custom_call.1
$region0: #{tpu_custom_call.1}
  #allocation0 [shape = 'u32[]', space=smem, size = 0x4, offset = 0x4, fixed_abs, tag = 'smem constant byte address 0x4 - core index']
  #allocation1 [shape = 'u32[144,128]{1,0:T(1,128)}', space=vmem, size = 0x12000, scoped, tag = 'internal scratch']
  %s0 = inlined_call_operand.hbm [shape: f32[2,4,256], index: 0, kind: input, shape index: {}]
  %s1 = inlined_call_operand.hbm [shape: f32[2,1,256], index: 1, kind: input, shape index: {}]
  %s2 = inlined_call_operand.hbm [shape: f32[2,4,384], index: 2, kind: output, shape index: {}]
  %s3 = sld [smem:[#allocation0]]
  $region30: #{tpu_custom_call.1} parent=0
    _
  %s5 = ssub.s32 1, %s3
  %s6 = scalar_select 0, %s5, %s3
  $region1: #{tpu_custom_call.1} parent=0
    #allocation2 [shape = 'u8[8192]{0}', space=vmem, size = 0x2000, scoped, tag = 'input window, operand 0, single buffered']
    #allocation3 [shape = 's32[1]{0}', space=sflag, size = 0x4, scoped, tag = 'scoped memory for tpu_custom_call.1']
    #allocation4 [shape = 's32[1]{0}', space=sflag, size = 0x4, scoped, tag = 'scoped memory for tpu_custom_call.1']
    #allocation5 [shape = 'u8[2048]{0}', space=vmem, size = 0x800, scoped, tag = 'input window, operand 1, single buffered']
    #allocation6 [shape = 's32[1]{0}', space=sflag, size = 0x4, scoped, tag = 'scoped memory for tpu_custom_call.1']
    #allocation7 [shape = 'u8[12288]{0}', space=vmem, size = 0x3000, scoped, tag = 'output window, operand 0, single buffered']
    %7 = vsyncpa [#allocation3], 0
    %8 = vsyncpa [#allocation6], 0
    %9 = vsyncpa [#allocation4], 0
    // Predicated region
    $region2: #{tpu_custom_call.1} parent=1 // pred_check
      _
    $region3: #{tpu_custom_call.1} parent=1 // pred_check_branch
      %11 = sbr.rel (0) target = $region5
    $region4: #{tpu_custom_call.1} parent=1 // pred_region
      %s13 = ssub.s32 256, 256
      %14 = vsyncadd [#allocation3], %s13
      %s15 = sshll.u32 [#allocation2], 4
      %s16 = int_to_ptr.vmem [resolvable:$true] %s15
      %21 = dma.hbm_to_vmem [thread:$0]  %s0, 256, %s16, [#allocation3], 128, 128, 8
    $region5: #{tpu_custom_call.1} parent=1 // pred_fallthru
      _
    // Predicated region
    $region6: #{tpu_custom_call.1} parent=1 // pred_check
      _
    $region7: #{tpu_custom_call.1} parent=1 // pred_check_branch
      %23 = sbr.rel (0) target = $region9
    $region8: #{tpu_custom_call.1} parent=1 // pred_region
      %s25 = ssub.s32 64, 64
      %26 = vsyncadd [#allocation6], %s25
      %s27 = sshll.u32 [#allocation5], 4
      %s28 = int_to_ptr.vmem [resolvable:$true] %s27
      %33 = dma.hbm_to_vmem [thread:$0]  %s1, 64, %s28, [#allocation6], 32, 32, 2
    $region9: #{tpu_custom_call.1} parent=1 // pred_fallthru
      _
    // Predicated region
    $region10: #{tpu_custom_call.1} parent=1 // pred_check
      _
    $region11: #{tpu_custom_call.1} parent=1 // pred_check_branch
      %35 = sbr.rel (0) target = $region13
    $region12: #{tpu_custom_call.1} parent=1 // pred_region
      %36 = dma.done [#allocation3], 256
    $region13: #{tpu_custom_call.1} parent=1 // pred_fallthru
      _
    // Predicated region
    $region14: #{tpu_custom_call.1} parent=1 // pred_check
      _
    $region15: #{tpu_custom_call.1} parent=1 // pred_check_branch
      %38 = sbr.rel (0) target = $region17
    $region16: #{tpu_custom_call.1} parent=1 // pred_region
      %39 = dma.done [#allocation6], 64
    $region17: #{tpu_custom_call.1} parent=1 // pred_fallthru
      _
    %p40 = scmp.eq.s32.totalorder 0, 0
    // Predicated region
    $region18: #{tpu_custom_call.1} parent=1 // pred_check
      %p41 = pneg %p40
    $region19: #{tpu_custom_call.1} parent=1 // pred_check_branch
      %43 = sbr.rel (%p41) target = $region21
    $region20: #{tpu_custom_call.1} parent=1 // pred_region
      %44 = vst [vmem:[#allocation7] sm:$0xff] 0.0
      %45 = vst [vmem:[#allocation7 + $0x8] sm:$0xf] 0.0
      %46 = vst [vmem:[#allocation7 + $0xc] sm:$0xff] 0.0
      %47 = vst [vmem:[#allocation7 + $0x14] sm:$0xf] 0.0
    $region21: #{tpu_custom_call.1} parent=1 // pred_fallthru
      _
    %v48 = vld [vmem:[#allocation2] sm:$0xff]
    %v49 = vld [vmem:[#allocation2 + $0x8] sm:$0xff]
    %v52 = vcombine.high %v48, %v48
    %v53 = vcombine.high %v49, %v49
    %vm56 = vcmask 1043456
    %v57 = vsel %vm56, %v48, -inf
    %v58 = vrot.slane %v57, 4
    %v59 = vmax.f32 %v57, %v58
    %v60 = vrot.slane %v59, 2
    %v61 = vmax.f32 %v59, %v60
    %v62 = vrot.slane %v61, 1
    %v63 = vmax.f32 %v61, %v62
    %v64 = vsel %vm56, %v52, -inf
    %v65 = vrot.slane %v64, 4
    %v66 = vmax.f32 %v64, %v65
    %v67 = vrot.slane %v66, 2
    %v68 = vmax.f32 %v66, %v67
    %v69 = vrot.slane %v68, 1
    %v70 = vmax.f32 %v68, %v69
    %v71 = vsel %vm56, %v49, -inf
    %v72 = vrot.slane %v71, 4
    %v73 = vmax.f32 %v71, %v72
    %v74 = vrot.slane %v73, 2
    %v75 = vmax.f32 %v73, %v74
    %v76 = vrot.slane %v75, 1
    %v77 = vmax.f32 %v75, %v76
    %v78 = vsel %vm56, %v53, -inf
    %v79 = vrot.slane %v78, 4
    %v80 = vmax.f32 %v78, %v79
    %v81 = vrot.slane %v80, 2
    %v82 = vmax.f32 %v80, %v81
    %v83 = vrot.slane %v82, 1
    %v84 = vmax.f32 %v82, %v83
    %v89 = vcombine.low %v63, %v70
    %v90 = vcombine.low %v77, %v84
    %v93 = vsub.f32 %v48, %v89
    %v94 = vsub.f32 %v49, %v90
    %v95 = vmul.f32 %v93, 1.442695
    %v96 = vpow.pop %v95
    %v97 = vmul.f32 %v94, 1.442695
    %v98 = vpow.pop %v97
    %v101 = vcombine.high %v96, %v96
    %v102 = vcombine.high %v98, %v98
    %v105 = vsel %vm56, %v96, 0.0
    %v106 = vrot.slane %v105, 4
    %v107 = vadd.f32 %v105, %v106
    %v108 = vrot.slane %v107, 2
    %v109 = vadd.f32 %v107, %v108
    %v110 = vrot.slane %v109, 1
    %v111 = vadd.f32 %v109, %v110
    %v112 = vsel %vm56, %v101, 0.0
    %v113 = vrot.slane %v112, 4
    %v114 = vadd.f32 %v112, %v113
    %v115 = vrot.slane %v114, 2
    %v116 = vadd.f32 %v114, %v115
    %v117 = vrot.slane %v116, 1
    %v118 = vadd.f32 %v116, %v117
    %v119 = vsel %vm56, %v98, 0.0
    %v120 = vrot.slane %v119, 4
    %v121 = vadd.f32 %v119, %v120
    %v122 = vrot.slane %v121, 2
    %v123 = vadd.f32 %v121, %v122
    %v124 = vrot.slane %v123, 1
    %v125 = vadd.f32 %v123, %v124
    %v126 = vsel %vm56, %v102, 0.0
    %v127 = vrot.slane %v126, 4
    %v128 = vadd.f32 %v126, %v127
    %v129 = vrot.slane %v128, 2
    %v130 = vadd.f32 %v128, %v129
    %v131 = vrot.slane %v130, 1
    %v132 = vadd.f32 %v130, %v131
    %v133 = vrcp.pop %v111
    %v134 = vrcp.pop %v118
    %v135 = vrcp.pop %v125
    %v136 = vrcp.pop %v132
    %v137 = vmul.f32 %v111, %v133
    %v138 = vmul.f32 %v118, %v134
    %v139 = vmul.f32 %v125, %v135
    %v140 = vmul.f32 %v132, %v136
    %v141 = vsub.f32 2.0, %v137
    %v142 = vsub.f32 2.0, %v138
    %v143 = vsub.f32 2.0, %v139
    %v144 = vsub.f32 2.0, %v140
    %v145 = vmul.f32 %v133, %v141
    %v146 = vmul.f32 %v134, %v142
    %v147 = vmul.f32 %v135, %v143
    %v148 = vmul.f32 %v136, %v144
    %v153 = vcombine.low %v145, %v146
    %v154 = vcombine.low %v147, %v148
    %v157 = vmul.f32 %v96, %v153
    %v158 = vmul.f32 %v98, %v154
    %v159 = vld [vmem:[#allocation5] sm:$0x3]
    %v160 = vld [vmem:[#allocation5 + $0x2] sm:$0x3]
    %v161 = vcvt.f32.s32.to.zero.pseudo %v159
    %v162 = vcvt.f32.s32.to.zero.pseudo %v160
    %v163 = vlaneseq
    %v164 = vshrl.u32 %v163, 7
    %v165 = vlaneseq
    %v166 = vshrl.u32 %v165, 7
    %v167 = vsub.s32 0, %v166
    %v168 = vrot.slane %v161, %v167
    %v169 = vlaneseq
    %v170 = vshrl.u32 %v169, 7
    %v171 = vsub.s32 1, %v170
    %v172 = vrot.slane %v161, %v171
    %v173 = vlaneseq
    %v174 = vshrl.u32 %v173, 7
    %v175 = vsub.s32 0, %v174
    %v176 = vrot.slane %v162, %v175
    %v177 = vlaneseq
    %v178 = vshrl.u32 %v177, 7
    %v179 = vsub.s32 1, %v178
    %v180 = vrot.slane %v162, %v179
    %vm181 = vcmp.eq.s32.totalorder %v168, %v164
    %vm182 = vcmp.eq.s32.totalorder %v172, %v164
    %vm183 = vcmp.eq.s32.totalorder %v176, %v164
    %vm184 = vcmp.eq.s32.totalorder %v180, %v164
    %v187 = vcombine.high %v157, %v157
    %v188 = vcombine.high %v158, %v158
    %v191 = vsel %vm181, %v157, 0.0
    %v192 = vsel %vm182, %v187, 0.0
    %v193 = vsel %vm183, %v158, 0.0
    %v194 = vsel %vm184, %v188, 0.0
    %v195 = vmul.f32 %v157, %v157
    %v196 = vmul.f32 %v158, %v158
    %v197 = vsel %vm181, 1, 0
    %v198 = vsel %vm182, 1, 0
    %v199 = vsel %vm183, 1, 0
    %v200 = vsel %vm184, 1, 0
    %v201 = vcvt.s32.f32 %v197
    %v202 = vcvt.s32.f32 %v198
    %v203 = vcvt.s32.f32 %v199
    %v204 = vcvt.s32.f32 %v200
    %v205 = vld [vmem:[#allocation7] sm:$0xf]
    %v206 = vld [vmem:[#allocation7 + $0xc] sm:$0xf]
    %v207 = vadd.f32 %v191, %v192
    %v208 = vadd.f32 %v193, %v194
    %v209 = vadd.f32 %v205, %v207
    %v210 = vadd.f32 %v206, %v208
    %211 = vst [vmem:[#allocation7] sm:$0xf] %v209
    %212 = vst [vmem:[#allocation7 + $0xc] sm:$0xf] %v210
    %v213 = vld [vmem:[#allocation7 + $0x4] sm:$0xf]
    %v214 = vld [vmem:[#allocation7 + $0x10] sm:$0xf]
    %v217 = vrot.slane %v195, 4
    %v218 = vrot.slane %v196, 4
    %v221 = vadd.f32 %v195, %v217
    %v222 = vadd.f32 %v196, %v218
    %v223 = vadd.f32 %v213, %v221
    %v224 = vadd.f32 %v214, %v222
    %225 = vst [vmem:[#allocation7 + $0x4] sm:$0xf] %v223
    %226 = vst [vmem:[#allocation7 + $0x10] sm:$0xf] %v224
    %v227 = vld [vmem:[#allocation7 + $0x8] sm:$0xf]
    %v228 = vld [vmem:[#allocation7 + $0x14] sm:$0xf]
    %v229 = vadd.f32 %v201, %v202
    %v230 = vadd.f32 %v203, %v204
    %v231 = vadd.f32 %v227, %v229
    %v232 = vadd.f32 %v228, %v230
    %233 = vst [vmem:[#allocation7 + $0x8] sm:$0xf] %v231
    %234 = vst [vmem:[#allocation7 + $0x14] sm:$0xf] %v232
    // Predicated region
    $region22: #{tpu_custom_call.1} parent=1 // pred_check
      _
    $region23: #{tpu_custom_call.1} parent=1 // pred_check_branch
      %236 = sbr.rel (0) target = $region25
    $region24: #{tpu_custom_call.1} parent=1 // pred_region
      %s238 = ssub.s32 384, 384
      %239 = vsyncadd [#allocation4], %s238
      %s240 = sshll.u32 [#allocation7], 4
      %s241 = int_to_ptr.vmem [resolvable:$true] %s240
      %246 = dma.vmem_to_hbm [thread:$0]  %s241, 384, %s2, [#allocation4], 192, 192, 12
    $region25: #{tpu_custom_call.1} parent=1 // pred_fallthru
      _
    // Predicated region
    $region26: #{tpu_custom_call.1} parent=1 // pred_check
      _
    $region27: #{tpu_custom_call.1} parent=1 // pred_check_branch
      %248 = sbr.rel (0) target = $region29
    $region28: #{tpu_custom_call.1} parent=1 // pred_region
      %249 = dma.done [#allocation4], 384
    $region29: #{tpu_custom_call.1} parent=1 // pred_fallthru
      _
    %250 = vsyncpa [#allocation3], 1
    %251 = vsyncpa [#allocation6], 1
    %252 = vsyncpa [#allocation4], 1

</llo_original>
